<compile_context>
chip_gen: v5e
topology: v5e:2x2
jax: 0.10.0
libtpu: 0.0.40
codegen_flags: <defaults>
</compile_context>

<pallas_src>
import functools

import jax
import jax.numpy as jnp
from jax import lax
from jax.experimental import pallas as pl
from jax.experimental.pallas import tpu as pltpu

EPS = 1e-5        # PyTorch InstanceNorm3d default eps
NEG_SLOPE = 0.2   # ConvBlock default: LeakyReLU(negative_slope=0.2)


def _round_up(x, m):
    return (x + m - 1) // m * m


def _conv_block_kernel(p_ref, w_ref, prm_ref, out_ref, sum_ref, ssq_ref,
                       *, S_total, S_tile, S_pad, n_si, neg_slope):
    # p_ref:   (1, K, S_tile)              bf16  im2col columns of spatial tile `si`
    # w_ref:   (C_pad8, K)                 bf16  full (Cin,kd,kh,kw)-flattened weights (resident)
    # prm_ref: (C_pad8, 3)                 f32   columns = [bias | gamma | beta]   (resident)
    # out_ref: (1, n_si, C_pad8, S_tile)   f32   resident per sample across the si axis
    # sum_ref / ssq_ref: (C_pad8, 1)       f32   running InstanceNorm statistics
    si = pl.program_id(1)

    @pl.when(si == 0)
    def _init_stats():
        sum_ref[...] = jnp.zeros_like(sum_ref)
        ssq_ref[...] = jnp.zeros_like(ssq_ref)

    # Whole conv for this spatial tile in one MXU pass (bf16 inputs, f32 accumulation).
    conv = jnp.dot(w_ref[...], p_ref[0], preferred_element_type=jnp.float32)
    conv = conv + prm_ref[:, 0:1]                                   # + bias  (C_pad8, S_tile)

    # Single-pass InstanceNorm statistics; mask spatially padded columns (only the last tile
    # can contain padding).
    if S_pad != S_total:
        col = si * S_tile + lax.broadcasted_iota(jnp.int32, conv.shape, 1)
        conv_valid = jnp.where(col < S_total, conv, 0.0)
    else:
        conv_valid = conv
    sum_ref[...] += jnp.sum(conv_valid, axis=1, keepdims=True)      # cross-lane XLU reduce
    ssq_ref[...] += jnp.sum(conv_valid * conv_valid, axis=1, keepdims=True)

    out_ref[0, si] = conv

    @pl.when(si == n_si - 1)
    def _finalize():
        inv_s = 1.0 / float(S_total)
        mean = sum_ref[...] * inv_s                                 # (C_pad8, 1)
        # TODO(synk): E[x^2]-mean^2 is cancellation-prone for |mean| >> std; switch to a
        # shifted single-pass scheme if tighter accuracy is ever needed.
        var = jnp.maximum(ssq_ref[...] * inv_s - mean * mean, 0.0)
        scale = lax.rsqrt(var + EPS) * prm_ref[:, 1:2]              # * gamma
        shift = prm_ref[:, 2:3]                                     # + beta

        def _norm_one(t, carry):                                    # per-slab epilogue
            y = (out_ref[0, t] - mean) * scale + shift
            out_ref[0, t] = jnp.where(y >= 0.0, y, neg_slope * y)   # LeakyReLU(0.2)
            return carry

        lax.fori_loop(0, n_si, _norm_one, 0)


def conv_block_forward(x, weight, bias, gamma, beta, *, k=4, s=2, p=1,
                       negative_slope=NEG_SLOPE, max_spatial_tile=1024):
    """x: (N, Cin, D, H, W) NCDHW.  weight: (Cout, Cin, k, k, k) (PyTorch Conv3d layout)."""
    N, Cin, D, H, W = x.shape
    Cout = weight.shape[0]
    Do = (D + 2 * p - k) // s + 1
    Ho = (H + 2 * p - k) // s + 1
    Wo = (W + 2 * p - k) // s + 1

    S_total = Do * Ho * Wo
    K = Cin * k * k * k                 # full contraction: (Cin, kd, kh, kw)
    C_pad8 = _round_up(Cout, 8)         # sublane-aligned channel count (no 128 padding)

    S_tile = min(max_spatial_tile, _round_up(S_total, 128))   # lane-dense spatial tile
    n_si = pl.cdiv(S_total, S_tile)
    S_pad = n_si * S_tile

    # ---- JAX glue (pure data movement): zero-pad, full im2col over (kd, kh, kw) ----
    xp = jnp.pad(x, ((0, 0), (0, 0), (p, p), (p, p), (p, p)))
    taps = []
    for kd in range(k):
        for kh in range(k):
            for kw in range(k):
                taps.append(xp[:, :, kd:kd + s * Do:s, kh:kh + s * Ho:s, kw:kw + s * Wo:s])
    patches = jnp.stack(taps, axis=2).reshape(N, K, S_total)        # K order = (Cin, taps)
    if S_pad != S_total:
        patches = jnp.pad(patches, ((0, 0), (0, 0), (0, S_pad - S_total)))
    patches = patches.astype(jnp.bfloat16)                          # halve HBM input bytes

    # Weights: (Cout, Cin, k, k, k) -> (C_pad8, K), bf16, matching the patches' K order.
    w2 = weight.reshape(Cout, K)
    if C_pad8 != Cout:
        w2 = jnp.pad(w2, ((0, C_pad8 - Cout), (0, 0)))
    w2 = w2.astype(jnp.bfloat16)

    # Merged parameter block: columns = [bias, gamma, beta].
    def _padc(v):
        return jnp.pad(v.astype(jnp.float32), ((0, C_pad8 - Cout),))
    prm = jnp.stack([_padc(bias), _padc(gamma), _padc(beta)], axis=1)   # (C_pad8, 3)

    # VMEM budget derived from actual block sizes (double-buffered inputs + resident output).
    patch_blk = K * S_tile * 2
    out_blk = n_si * C_pad8 * S_tile * 4
    w_bytes = C_pad8 * K * 2
    vmem_need = 2 * patch_blk + 2 * out_blk + 2 * w_bytes + (2 << 20)
    vmem_limit = int(min(max(2 * vmem_need, 32 << 20), 64 << 20))

    kernel = functools.partial(
        _conv_block_kernel,
        S_total=S_total, S_tile=S_tile, S_pad=S_pad, n_si=n_si,
        neg_slope=negative_slope)

    out = pl.pallas_call(
        kernel,
        out_shape=jax.ShapeDtypeStruct((N, n_si, C_pad8, S_tile), jnp.float32),
        grid_spec=pltpu.PrefetchScalarGridSpec(
            num_scalar_prefetch=0,
            grid=(N, n_si),
            in_specs=[
                pl.BlockSpec((1, K, S_tile), lambda n, si: (n, 0, si)),
                pl.BlockSpec((C_pad8, K), lambda n, si: (0, 0)),       # resident weights
                pl.BlockSpec((C_pad8, 3), lambda n, si: (0, 0)),       # resident params
            ],
            out_specs=pl.BlockSpec((1, n_si, C_pad8, S_tile),
                                   lambda n, si: (n, 0, 0, 0)),        # resident across si
            scratch_shapes=[
                pltpu.VMEM((C_pad8, 1), jnp.float32),   # running sum
                pltpu.VMEM((C_pad8, 1), jnp.float32),   # running sum of squares
            ],
        ),
        compiler_params=pltpu.CompilerParams(
            dimension_semantics=("parallel", "arbitrary"),
            vmem_limit_bytes=vmem_limit,
        ),
    )(patches, w2, prm)

    # (N, n_si, C, S_tile) -> (N, C, S) -> NCDHW.  For n_si == 1 the transpose is a no-op.
    out = jnp.transpose(out, (0, 2, 1, 3)).reshape(N, C_pad8, S_pad)
    out = out[:, :Cout, :S_total].reshape(N, Cout, Do, Ho, Wo)
    return out


def _reference(x, weight, bias, gamma, beta, *, k=4, s=2, p=1, negative_slope=NEG_SLOPE):
    """Pure-JAX reference matching PyTorch Conv3d + InstanceNorm3d(affine) + LeakyReLU(0.2)."""
    conv = lax.conv_general_dilated(
        x, weight, window_strides=(s, s, s), padding=[(p, p)] * 3,
        dimension_numbers=('NCDHW', 'OIDHW', 'NCDHW'),
        precision=lax.Precision.HIGHEST)
    conv = conv + bias.reshape(1, -1, 1, 1, 1)
    mean = jnp.mean(conv, axis=(2, 3, 4), keepdims=True)
    var = jnp.mean(jnp.square(conv - mean), axis=(2, 3, 4), keepdims=True)
    y = (conv - mean) / jnp.sqrt(var + EPS)
    y = y * gamma.reshape(1, -1, 1, 1, 1) + beta.reshape(1, -1, 1, 1, 1)
    return jnp.where(y >= 0.0, y, negative_slope * y)


if __name__ == "__main__":
    key = jax.random.PRNGKey(0)
    kx, kw_, kb, kg, kbe = jax.random.split(key, 5)

    N, Cin, Cout = 2, 4, 8
    D = H = W = 16
    k, s, p = 4, 2, 1

    x = jax.random.normal(kx, (N, Cin, D, H, W), dtype=jnp.float32)
    # Conv3d weight: (out_dim, in_dim, k, k, k); bias: (out_dim,)
    weight = 0.1 * jax.random.normal(kw_, (Cout, Cin, k, k, k), dtype=jnp.float32)
    bias = 0.1 * jax.random.normal(kb, (Cout,), dtype=jnp.float32)
    # InstanceNorm3d affine params
    gamma = 1.0 + 0.1 * jax.random.normal(kg, (Cout,), dtype=jnp.float32)
    beta = 0.1 * jax.random.normal(kbe, (Cout,), dtype=jnp.float32)

    out = conv_block_forward(x, weight, bias, gamma, beta, k=k, s=s, p=p)
    out = jax.block_until_ready(out)

    Do = (D + 2 * p - k) // s + 1
    assert out.shape == (N, Cout, Do, Do, Do)

    # Tight check vs. a reference using the same bf16-rounded conv inputs (kernel uses bf16
    # MXU inputs with f32 accumulation), plus a looser check vs. the full-f32 reference.
    xq = x.astype(jnp.bfloat16).astype(jnp.float32)
    wq = weight.astype(jnp.bfloat16).astype(jnp.float32)
    ref_q = _reference(xq, wq, bias, gamma, beta, k=k, s=s, p=p)
    ref_f = _reference(x, weight, bias, gamma, beta, k=k, s=s, p=p)

    assert jnp.allclose(out, ref_q, atol=2e-3, rtol=2e-3), float(jnp.max(jnp.abs(out - ref_q)))
    assert jnp.allclose(out, ref_f, atol=3e-2, rtol=3e-2), float(jnp.max(jnp.abs(out - ref_f)))

    print("KERNEL_OK")
</pallas_src>

<mosaic_0001>
module attributes {stable_mosaic.version = 11 : i64} {
  func.func @_conv_block_kernel(%arg0: i32, %arg1: i32, %arg2: memref<1x256x512xbf16, #tpu.memory_space<vmem>>, %arg3: memref<8x256xbf16, #tpu.memory_space<vmem>>, %arg4: memref<8x3xf32, #tpu.memory_space<vmem>>, %arg5: memref<1x1x8x512xf32, #tpu.memory_space<vmem>>, %arg6: memref<8x1xf32, #tpu.memory_space<vmem>>, %arg7: memref<8x1xf32, #tpu.memory_space<vmem>>) attributes {dimension_semantics = [#tpu.dimension_semantics<parallel>, #tpu.dimension_semantics<arbitrary>], iteration_bounds = array<i64: 2, 1>, scalar_prefetch = 0 : i64, scratch_operands = 2 : i64, tpu.core_type = #tpu.core_type<tc>, window_params = [{transform_indices = @transform_0, window_bounds = array<i64: 1, 256, 512>}, {pipeline_mode = #tpu.pipeline_mode<synchronous>, transform_indices = @transform_1, window_bounds = array<i64: 8, 256>}, {pipeline_mode = #tpu.pipeline_mode<synchronous>, transform_indices = @transform_2, window_bounds = array<i64: 8, 3>}, {transform_indices = @transform_3, window_bounds = array<i64: 1, 1, 8, 512>}]} {
    %c0_i32 = arith.constant 0 : i32
    %0 = arith.cmpi eq, %arg1, %c0_i32 : i32
    %1 = arith.extui %0 : i1 to i32
    %c0_i32_0 = arith.constant 0 : i32
    %2 = arith.cmpi ne, %1, %c0_i32_0 : i32
    scf.if %2 {
      %cst_22 = arith.constant 0.000000e+00 : f32
      %28 = vector.broadcast %cst_22 : f32 to vector<8x1xf32>
      %c0_23 = arith.constant 0 : index
      %c0_24 = arith.constant 0 : index
      %29 = vector.load %arg6[%c0_23, %c0_24] : memref<8x1xf32, #tpu.memory_space<vmem>>, vector<8x1xf32>
      tpu.vector_store %arg6[%c0_23, %c0_24], %28 {strides = array<i32>} : memref<8x1xf32, #tpu.memory_space<vmem>>, vector<8x1xf32>,
      %cst_25 = arith.constant 0.000000e+00 : f32
      %30 = vector.broadcast %cst_25 : f32 to vector<8x1xf32>
      %c0_26 = arith.constant 0 : index
      %c0_27 = arith.constant 0 : index
      %31 = vector.load %arg7[%c0_26, %c0_27] : memref<8x1xf32, #tpu.memory_space<vmem>>, vector<8x1xf32>
      tpu.vector_store %arg7[%c0_26, %c0_27], %30 {strides = array<i32>} : memref<8x1xf32, #tpu.memory_space<vmem>>, vector<8x1xf32>,
    } else {
    }
    %c0 = arith.constant 0 : index
    %c0_1 = arith.constant 0 : index
    %3 = vector.load %arg3[%c0, %c0_1] : memref<8x256xbf16, #tpu.memory_space<vmem>>, vector<8x256xbf16>
    %c0_2 = arith.constant 0 : index
    %c0_3 = arith.constant 0 : index
    %c0_4 = arith.constant 0 : index
    %4 = vector.load %arg2[%c0_2, %c0_3, %c0_4] : memref<1x256x512xbf16, #tpu.memory_space<vmem>>, vector<1x256x512xbf16>
    %5 = vector.shape_cast %4 : vector<1x256x512xbf16> to vector<256x512xbf16>
    %cst = arith.constant dense<0.000000e+00> : vector<8x512xf32>
    %6 = tpu.matmul %3, %5, %cst {dimension_numbers = #tpu.dot_dimension_numbers<[1], [0], [0], [1], [0, 0, 1, 1], [], []>} : vector<8x256xbf16>, vector<256x512xbf16>, vector<8x512xf32> -> vector<8x512xf32>
    %c0_5 = arith.constant 0 : index
    %c0_6 = arith.constant 0 : index
    %7 = vector.load %arg4[%c0_5, %c0_6] : memref<8x3xf32, #tpu.memory_space<vmem>>, vector<8x1xf32>
    %8 = vector.broadcast %7 : vector<8x1xf32> to vector<8x512xf32>
    %9 = arith.addf %6, %8 : vector<8x512xf32>
    %c0_7 = arith.constant 0 : index
    %c0_8 = arith.constant 0 : index
    %10 = vector.load %arg6[%c0_7, %c0_8] : memref<8x1xf32, #tpu.memory_space<vmem>>, vector<8x1xf32>
    %cst_9 = arith.constant dense<0.000000e+00> : vector<8xf32>
    %11 = vector.multi_reduction <add>, %9, %cst_9 [1] : vector<8x512xf32> to vector<8xf32>
    %12 = vector.shape_cast %11 : vector<8xf32> to vector<8x1xf32>
    %13 = arith.addf %10, %12 : vector<8x1xf32>
    %c0_10 = arith.constant 0 : index
    %c0_11 = arith.constant 0 : index
    %14 = vector.load %arg6[%c0_10, %c0_11] : memref<8x1xf32, #tpu.memory_space<vmem>>, vector<8x1xf32>
    tpu.vector_store %arg6[%c0_10, %c0_11], %13 {strides = array<i32>} : memref<8x1xf32, #tpu.memory_space<vmem>>, vector<8x1xf32>,
    %c0_12 = arith.constant 0 : index
    %c0_13 = arith.constant 0 : index
    %15 = vector.load %arg7[%c0_12, %c0_13] : memref<8x1xf32, #tpu.memory_space<vmem>>, vector<8x1xf32>
    %16 = arith.mulf %9, %9 : vector<8x512xf32>
    %cst_14 = arith.constant dense<0.000000e+00> : vector<8xf32>
    %17 = vector.multi_reduction <add>, %16, %cst_14 [1] : vector<8x512xf32> to vector<8xf32>
    %18 = vector.shape_cast %17 : vector<8xf32> to vector<8x1xf32>
    %19 = arith.addf %15, %18 : vector<8x1xf32>
    %c0_15 = arith.constant 0 : index
    %c0_16 = arith.constant 0 : index
    %20 = vector.load %arg7[%c0_15, %c0_16] : memref<8x1xf32, #tpu.memory_space<vmem>>, vector<8x1xf32>
    tpu.vector_store %arg7[%c0_15, %c0_16], %19 {strides = array<i32>} : memref<8x1xf32, #tpu.memory_space<vmem>>, vector<8x1xf32>,
    %c0_17 = arith.constant 0 : index
    %21 = arith.index_cast %arg1 : i32 to index
    %c0_18 = arith.constant 0 : index
    %c0_19 = arith.constant 0 : index
    %22 = vector.load %arg5[%c0_17, %21, %c0_18, %c0_19] : memref<1x1x8x512xf32, #tpu.memory_space<vmem>>, vector<1x1x8x512xf32>
    %23 = vector.shape_cast %22 : vector<1x1x8x512xf32> to vector<8x512xf32>
    %24 = vector.shape_cast %9 : vector<8x512xf32> to vector<1x1x8x512xf32>
    tpu.vector_store %arg5[%c0_17, %21, %c0_18, %c0_19], %24 {strides = array<i32>} : memref<1x1x8x512xf32, #tpu.memory_space<vmem>>, vector<1x1x8x512xf32>,
    %c0_i32_20 = arith.constant 0 : i32
    %25 = arith.cmpi eq, %arg1, %c0_i32_20 : i32
    %26 = arith.extui %25 : i1 to i32
    %c0_i32_21 = arith.constant 0 : i32
    %27 = arith.cmpi ne, %26, %c0_i32_21 : i32
    scf.if %27 {
      %c0_22 = arith.constant 0 : index
      %c0_23 = arith.constant 0 : index
      %28 = vector.load %arg6[%c0_22, %c0_23] : memref<8x1xf32, #tpu.memory_space<vmem>>, vector<8x1xf32>
      %cst_24 = arith.constant 0.001953125 : f32
      %29 = vector.broadcast %cst_24 : f32 to vector<8x1xf32>
      %30 = arith.mulf %28, %29 : vector<8x1xf32>
      %c0_25 = arith.constant 0 : index
      %c0_26 = arith.constant 0 : index
      %31 = vector.load %arg7[%c0_25, %c0_26] : memref<8x1xf32, #tpu.memory_space<vmem>>, vector<8x1xf32>
      %cst_27 = arith.constant 0.001953125 : f32
      %32 = vector.broadcast %cst_27 : f32 to vector<8x1xf32>
      %33 = arith.mulf %31, %32 : vector<8x1xf32>
      %34 = arith.mulf %30, %30 : vector<8x1xf32>
      %35 = arith.subf %33, %34 : vector<8x1xf32>
      %cst_28 = arith.constant 0.000000e+00 : f32
      %36 = vector.broadcast %cst_28 : f32 to vector<8x1xf32>
      %37 = arith.maximumf %35, %36 : vector<8x1xf32>
      %cst_29 = arith.constant 9.99999974E-6 : f32
      %38 = vector.broadcast %cst_29 : f32 to vector<8x1xf32>
      %39 = arith.addf %37, %38 : vector<8x1xf32>
      %40 = math.rsqrt %39 : vector<8x1xf32>
      %c0_30 = arith.constant 0 : index
      %c1 = arith.constant 1 : index
      %41 = vector.load %arg4[%c0_30, %c1] : memref<8x3xf32, #tpu.memory_space<vmem>>, vector<8x1xf32>
      %42 = arith.mulf %40, %41 : vector<8x1xf32>
      %c0_31 = arith.constant 0 : index
      %c2 = arith.constant 2 : index
      %43 = vector.load %arg4[%c0_31, %c2] : memref<8x3xf32, #tpu.memory_space<vmem>>, vector<8x1xf32>
      %c0_i32_32 = arith.constant 0 : i32
      %c0_33 = arith.constant 0 : index
      %44 = arith.index_cast %c0_i32_32 : i32 to index
      %c0_34 = arith.constant 0 : index
      %c0_35 = arith.constant 0 : index
      %45 = vector.load %arg5[%c0_33, %44, %c0_34, %c0_35] : memref<1x1x8x512xf32, #tpu.memory_space<vmem>>, vector<1x1x8x512xf32>
      %46 = vector.shape_cast %45 : vector<1x1x8x512xf32> to vector<8x512xf32>
      %47 = vector.broadcast %30 : vector<8x1xf32> to vector<8x512xf32>
      %48 = arith.subf %46, %47 : vector<8x512xf32>
      %49 = vector.broadcast %42 : vector<8x1xf32> to vector<8x512xf32>
      %50 = arith.mulf %48, %49 : vector<8x512xf32>
      %51 = vector.broadcast %43 : vector<8x1xf32> to vector<8x512xf32>
      %52 = arith.addf %50, %51 : vector<8x512xf32>
      %cst_36 = arith.constant 0.000000e+00 : f32
      %53 = vector.broadcast %cst_36 : f32 to vector<8x512xf32>
      %54 = arith.cmpf oge, %52, %53 : vector<8x512xf32>
      %cst_37 = arith.constant 2.000000e-01 : f32
      %55 = vector.broadcast %cst_37 : f32 to vector<8x512xf32>
      %56 = arith.mulf %55, %52 : vector<8x512xf32>
      %57 = arith.select %54, %52, %56 : vector<8x512xi1>, vector<8x512xf32>
      %c0_38 = arith.constant 0 : index
      %58 = arith.index_cast %c0_i32_32 : i32 to index
      %c0_39 = arith.constant 0 : index
      %c0_40 = arith.constant 0 : index
      %59 = vector.load %arg5[%c0_38, %58, %c0_39, %c0_40] : memref<1x1x8x512xf32, #tpu.memory_space<vmem>>, vector<1x1x8x512xf32>
      %60 = vector.shape_cast %59 : vector<1x1x8x512xf32> to vector<8x512xf32>
      %61 = vector.shape_cast %57 : vector<8x512xf32> to vector<1x1x8x512xf32>
      tpu.vector_store %arg5[%c0_38, %58, %c0_39, %c0_40], %61 {strides = array<i32>} : memref<1x1x8x512xf32, #tpu.memory_space<vmem>>, vector<1x1x8x512xf32>,
      %c1_i32 = arith.constant 1 : i32
    } else {
    }
    return
  }
  func.func @transform_0(%arg0: i32, %arg1: i32) -> (i32, i32, i32) {
    %c0_i32 = arith.constant 0 : i32
    %c0_i32_0 = arith.constant 0 : i32
    return %arg0, %c0_i32, %arg1 : i32, i32, i32
  }
  func.func @transform_1(%arg0: i32, %arg1: i32) -> (i32, i32) {
    %c0_i32 = arith.constant 0 : i32
    %c0_i32_0 = arith.constant 0 : i32
    %c0_i32_1 = arith.constant 0 : i32
    return %c0_i32, %c0_i32_0 : i32, i32
  }
  func.func @transform_2(%arg0: i32, %arg1: i32) -> (i32, i32) {
    %c0_i32 = arith.constant 0 : i32
    %c0_i32_0 = arith.constant 0 : i32
    %c0_i32_1 = arith.constant 0 : i32
    return %c0_i32, %c0_i32_0 : i32, i32
  }
  func.func @transform_3(%arg0: i32, %arg1: i32) -> (i32, i32, i32, i32) {
    %c0_i32 = arith.constant 0 : i32
    %c0_i32_0 = arith.constant 0 : i32
    %c0_i32_1 = arith.constant 0 : i32
    %c0_i32_2 = arith.constant 0 : i32
    return %arg0, %c0_i32, %c0_i32_0, %c0_i32_1 : i32, i32, i32, i32
  }
}

</mosaic_0001>

<llo_original>
// kernel: tpu_custom_call.1
$region0: #{tpu_custom_call.1}
  #allocation0 [shape = 'u32[]', space=smem, size = 0x4, offset = 0x4, fixed_abs, tag = 'smem constant byte address 0x4 - core index']
  #allocation1 [shape = 'u32[72,128]{1,0:T(1,128)}', space=vmem, size = 0x9000, scoped, tag = 'internal scratch']
  #allocation2 [shape = 'f32[8,1]{1,0:T(8,128)}', space=vmem, size = 0x1000, scoped, tag = 'scratch operand']
  #allocation3 [shape = 'f32[8,1]{1,0:T(8,128)}', space=vmem, size = 0x1000, scoped, tag = 'scratch operand']
  %s0 = inlined_call_operand.hbm [shape: bf16[2,256,512], index: 0, kind: input, shape index: {}]
  %s1 = inlined_call_operand.vmem [shape: bf16[8,256], index: 1, kind: input, shape index: {}]
  %s2 = inlined_call_operand.vmem [shape: f32[8,3], index: 2, kind: input, shape index: {}]
  %s3 = inlined_call_operand.hbm [shape: f32[2,1,8,512], index: 3, kind: output, shape index: {}]
  %s4 = sld [smem:[#allocation0]]
  $region57: #{tpu_custom_call.1} parent=0
    _
  %s6 = ssub.s32 1, %s4
  %s7 = scalar_select 0, %s6, %s4
  $region1: #{tpu_custom_call.1} parent=0
    #allocation4 [shape = 'u8[524288]{0}', space=vmem, size = 0x80000, scoped, tag = 'input window, operand 0']
    #allocation5 [shape = 's32[2]{0}', space=sflag, size = 0x8, scoped, tag = 'scoped memory for tpu_custom_call.1']
    #allocation6 [shape = 's32[2]{0}', space=sflag, size = 0x8, scoped, tag = 'scoped memory for tpu_custom_call.1']
    #allocation7 [shape = 'u8[32768]{0}', space=vmem, size = 0x8000, scoped, tag = 'output window, operand 0']
    %8 = vsyncpa [#allocation5], 0
    %s9 = scalar_lea.sflag [#allocation5], 1
    %10 = vsyncpa %s9, 0
    %11 = vsyncpa [#allocation6], 0
    %s12 = scalar_lea.sflag [#allocation6], 1
    %13 = vsyncpa %s12, 0
    loop: start=0, step=1, limit=4
    $region2: #{tpu_custom_call.1} parent=1 // loop_pre_header
      _
    $region3: #{tpu_custom_call.1} parent=1 // loop_header
      %s15 = sphi 0, %s19
      %p16 = scmp.ge.s32.totalorder %s15, 4
      %s22 = sphi 0, %s34
      %s23 = sphi 0, %s30
      %s24 = sphi 0, %s22
      %s25 = sphi 0, %s23
      %s26 = sphi 0, %s24
      %s27 = sphi 0, %s25
      %s39 = sphi 0, %s41
      %s42 = sphi 0, %s39
      %s43 = sphi 0, %s42
      %s59 = sphi 0, %s43
      %s63 = sphi 0, %s63
      %s65 = sphi 0, %s63
      %s66 = sphi 0, %s65
      %s80 = sphi 0, %s66
      %s84 = sphi 0, %s84
      %s86 = sphi 0, %s84
      %s87 = sphi 0, %s86
      %s101 = sphi 0, %s87
      %s107 = sphi 0, %s109
      %s110 = sphi 0, %s107
      %s111 = sphi 0, %s110
      %s127 = sphi 0, %s111
    $region4: #{tpu_custom_call.1} parent=1 // loop_header_branch
      %18 = sbr.rel (%p16) target = $region8
    $region5: #{tpu_custom_call.1} parent=1 // loop_body
      %s20 = ssub.s32 %s15, 1
      %s21 = ssub.s32 %s15, 2
      %s28 = sadd.s32 1, %s23
      %p29 = scmp.ge.s32.totalorder %s28, 1
      %s30 = scalar_select %p29, 0, %s28
      %s31 = sadd.s32 1, %s22
      %s32 = scalar_select %p29, %s31, %s22
      %p33 = scmp.ge.s32.totalorder %s32, 2
      %s34 = scalar_select %p33, 0, %s32
      %s35 = ssub.s32 %s22, %s34
      %s36 = ssub.s32 %s23, %s30
      %s37 = sor.u32 %s35, %s36
      %p38 = scmp.eq.s32.totalorder %s37, 0
      %s40 = sadd.s32 %s39, 1
      %s41 = scalar_select %p38, %s39, %s40
      %p44 = pneg %p38
      %p45 = scmp.eq.s32.totalorder %s15, 1
      %p46 = por %p44, %p45
      %p47 = scmp.ne.s32.totalorder %s39, %s42
      %p48 = scmp.eq.s32.totalorder %s15, 0
      %p49 = por %p47, %p48
      %p50 = scmp.ne.s32.totalorder %s39, %s42
      %p51 = scmp.eq.s32.totalorder %s20, 1
      %p52 = por %p50, %p51
      %p53 = scmp.ne.s32.totalorder %s42, %s43
      %p54 = scmp.eq.s32.totalorder %s20, 0
      %p55 = por %p53, %p54
      %p56 = scmp.ne.s32.totalorder %s42, %s43
      %p57 = scmp.eq.s32.totalorder %s21, 1
      %p58 = por %p56, %p57
      %p60 = scmp.ne.s32.totalorder %s43, %s59
      %p61 = scmp.eq.s32.totalorder %s21, 0
      %p62 = por %p60, %p61
      %s64 = sadd.s32 %s63, 1
      %p67 = scmp.eq.s32.totalorder %s15, 1
      %p68 = scmp.ne.s32.totalorder %s63, %s65
      %p69 = scmp.eq.s32.totalorder %s15, 0
      %p70 = por %p68, %p69
      %p71 = scmp.ne.s32.totalorder %s63, %s65
      %p72 = scmp.eq.s32.totalorder %s20, 1
      %p73 = por %p71, %p72
      %p74 = scmp.ne.s32.totalorder %s65, %s66
      %p75 = scmp.eq.s32.totalorder %s20, 0
      %p76 = por %p74, %p75
      %p77 = scmp.ne.s32.totalorder %s65, %s66
      %p78 = scmp.eq.s32.totalorder %s21, 1
      %p79 = por %p77, %p78
      %p81 = scmp.ne.s32.totalorder %s66, %s80
      %p82 = scmp.eq.s32.totalorder %s21, 0
      %p83 = por %p81, %p82
      %s85 = sadd.s32 %s84, 1
      %p88 = scmp.eq.s32.totalorder %s15, 1
      %p89 = scmp.ne.s32.totalorder %s84, %s86
      %p90 = scmp.eq.s32.totalorder %s15, 0
      %p91 = por %p89, %p90
      %p92 = scmp.ne.s32.totalorder %s84, %s86
      %p93 = scmp.eq.s32.totalorder %s20, 1
      %p94 = por %p92, %p93
      %p95 = scmp.ne.s32.totalorder %s86, %s87
      %p96 = scmp.eq.s32.totalorder %s20, 0
      %p97 = por %p95, %p96
      %p98 = scmp.ne.s32.totalorder %s86, %s87
      %p99 = scmp.eq.s32.totalorder %s21, 1
      %p100 = por %p98, %p99
      %p102 = scmp.ne.s32.totalorder %s87, %s101
      %p103 = scmp.eq.s32.totalorder %s21, 0
      %p104 = por %p102, %p103
      %s105 = ssub.s32 %s22, %s34
      %p106 = scmp.eq.s32.totalorder %s105, 0
      %s108 = sadd.s32 %s107, 1
      %s109 = scalar_select %p106, %s107, %s108
      %p112 = pneg %p106
      %p113 = scmp.eq.s32.totalorder %s15, 1
      %p114 = por %p112, %p113
      %p115 = scmp.ne.s32.totalorder %s107, %s110
      %p116 = scmp.eq.s32.totalorder %s15, 0
      %p117 = por %p115, %p116
      %p118 = scmp.ne.s32.totalorder %s107, %s110
      %p119 = scmp.eq.s32.totalorder %s20, 1
      %p120 = por %p118, %p119
      %p121 = scmp.ne.s32.totalorder %s110, %s111
      %p122 = scmp.eq.s32.totalorder %s20, 0
      %p123 = por %p121, %p122
      %p124 = scmp.ne.s32.totalorder %s110, %s111
      %p125 = scmp.eq.s32.totalorder %s21, 1
      %p126 = por %p124, %p125
      %p128 = scmp.ne.s32.totalorder %s111, %s127
      %p129 = scmp.eq.s32.totalorder %s21, 0
      %p130 = por %p128, %p129
      %p131 = scmp.le.s32.totalorder 1, %s15
      %p132 = scmp.lt.s32.totalorder %s15, 3
      %p133 = pnand %p131, %p132
      %p134 = pneg %p133
      // Predicated region
      $region9: #{tpu_custom_call.1} parent=5 // pred_check
        _
      $region10: #{tpu_custom_call.1} parent=5 // pred_check_branch
        %136 = sbr.rel (%p133) target = $region12
      $region11: #{tpu_custom_call.1} parent=5 // pred_region
        %s137 = ssub.s32 %s15, 1
        // Predicated region
        $region13: #{tpu_custom_call.1} parent=11 // pred_check
          %p138 = pneg %p76
        $region14: #{tpu_custom_call.1} parent=11 // pred_check_branch
          %140 = sbr.rel (%p138) target = $region16
        $region15: #{tpu_custom_call.1} parent=11 // pred_region
          _
        $region16: #{tpu_custom_call.1} parent=11 // pred_fallthru
          _
        // Predicated region
        $region17: #{tpu_custom_call.1} parent=11 // pred_check
          %p141 = pneg %p97
        $region18: #{tpu_custom_call.1} parent=11 // pred_check_branch
          %143 = sbr.rel (%p141) target = $region20
        $region19: #{tpu_custom_call.1} parent=11 // pred_region
          _
        $region20: #{tpu_custom_call.1} parent=11 // pred_fallthru
          _
      $region12: #{tpu_custom_call.1} parent=5 // pred_fallthru
        _
      %p144 = scmp.lt.s32.totalorder %s15, 2
      // Predicated region
      $region21: #{tpu_custom_call.1} parent=5 // pred_check
        %p145 = pneg %p144
      $region22: #{tpu_custom_call.1} parent=5 // pred_check_branch
        %147 = sbr.rel (%p145) target = $region24
      $region23: #{tpu_custom_call.1} parent=5 // pred_region
        // Predicated region
        $region25: #{tpu_custom_call.1} parent=23 // pred_check
          %p148 = pneg %p49
        $region26: #{tpu_custom_call.1} parent=23 // pred_check_branch
          %150 = sbr.rel (%p148) target = $region28
        $region27: #{tpu_custom_call.1} parent=23 // pred_region
          %s151 = sand.u32 %s39, 1
          %s152 = scalar_lea.sflag [#allocation5], %s151
          %s153 = sand.u32 %s39, 1
          %s154 = smul.addr %s153, 512
          %s155 = scalar_lea.vmem [#allocation4], %s154
          %s156 = smul.u32 4, %s23
          %158 = vsyncadd %s152, 0
          %s159 = smul.addr %s22, 128
          %s160 = sadd.s32 %s156, %s159
          %s161 = smul.addr %s160, 4
          %s162 = scalar_lea.hbm %s0, %s161
          %s163 = sshll.u32 %s162, 4
          %s164 = int_to_ptr.hbm [resolvable:$true] %s163
          %s165 = sshll.u32 %s155, 4
          %s166 = int_to_ptr.vmem [resolvable:$true] %s165
          %171 = dma.hbm_to_vmem [thread:$0]  %s164, 8192, %s166, %s152, 256, 256, 16
        $region28: #{tpu_custom_call.1} parent=23 // pred_fallthru
          _
      $region24: #{tpu_custom_call.1} parent=5 // pred_fallthru
        _
      %p172 = scmp.le.s32.totalorder 1, %s15
      %p173 = scmp.lt.s32.totalorder %s15, 3
      %p174 = pnand %p172, %p173
      %p175 = pneg %p174
      // Predicated region
      $region29: #{tpu_custom_call.1} parent=5 // pred_check
        _
      $region30: #{tpu_custom_call.1} parent=5 // pred_check_branch
        %177 = sbr.rel (%p174) target = $region32
      $region31: #{tpu_custom_call.1} parent=5 // pred_region
        %s178 = ssub.s32 %s15, 1
        %s179 = sand.u32 %s42, 1
        %s180 = scalar_lea.sflag [#allocation5], %s179
        %s181 = sand.u32 %s42, 1
        %s182 = smul.addr %s181, 512
        %s183 = scalar_lea.vmem [#allocation4], %s182
        // Predicated region
        $region33: #{tpu_custom_call.1} parent=31 // pred_check
          %p184 = pneg %p55
        $region34: #{tpu_custom_call.1} parent=31 // pred_check_branch
          %186 = sbr.rel (%p184) target = $region36
        $region35: #{tpu_custom_call.1} parent=31 // pred_region
          %188 = dma.done %s180, 8192
        $region36: #{tpu_custom_call.1} parent=31 // pred_fallthru
          _
        %s189 = sand.u32 %s42, 1
        %s190 = scalar_lea.sflag [#allocation5], %s189
        %s191 = sand.u32 %s42, 1
        %s192 = smul.addr %s191, 512
        %s193 = scalar_lea.vmem [#allocation4], %s192
        %p194 = pneg %p55
        %p195 = pneg %p52
        %p196 = pneg %p76
        %p197 = pneg %p73
        %p198 = pneg %p97
        %p199 = pneg %p94
        %p200 = pneg %p123
        %p201 = pneg %p120
        %s202 = sand.u32 %s110, 1
        %s203 = scalar_lea.sflag [#allocation6], %s202
        %s204 = sand.u32 %s110, 1
        %s205 = smul.addr %s204, 32
        %s206 = scalar_lea.vmem [#allocation7], %s205
        %s207 = smul.u32 4, %s25
        %p208 = scmp.eq.s32.totalorder %s25, 0
        // Predicated region
        $region37: #{tpu_custom_call.1} parent=31 // pred_check
          %p209 = pneg %p208
        $region38: #{tpu_custom_call.1} parent=31 // pred_check_branch
          %211 = sbr.rel (%p209) target = $region40
        $region39: #{tpu_custom_call.1} parent=31 // pred_region
          %vm212 = vcmask 7168
          %213 = vst.msk [vmem:[#allocation2] sm:$0xff] %vm212, 0.0
          %214 = vst.msk [vmem:[#allocation3] sm:$0xff] %vm212, 0.0
        $region40: #{tpu_custom_call.1} parent=31 // pred_fallthru
          _
        %v215 = vld [vmem:[%s1] sm:$0xff]
        %v216 = vld [vmem:[%s183] sm:$0xff]
        %v217 = vld [vmem:[%s183 + $0x8] sm:$0xff]
        %v218 = vld [vmem:[%s183 + $0x10] sm:$0xff]
        %v219 = vld [vmem:[%s183 + $0x18] sm:$0xff]
        %v220 = vld [vmem:[%s183 + $0x20] sm:$0xff]
        %v221 = vld [vmem:[%s183 + $0x28] sm:$0xff]
        %v222 = vld [vmem:[%s183 + $0x30] sm:$0xff]
        %v223 = vld [vmem:[%s183 + $0x38] sm:$0xff]
        %v224 = vld [vmem:[%s183 + $0x40] sm:$0xff]
        %v225 = vld [vmem:[%s183 + $0x48] sm:$0xff]
        %v226 = vld [vmem:[%s183 + $0x50] sm:$0xff]
        %v227 = vld [vmem:[%s183 + $0x58] sm:$0xff]
        %v228 = vld [vmem:[%s183 + $0x60] sm:$0xff]
        %v229 = vld [vmem:[%s183 + $0x68] sm:$0xff]
        %v230 = vld [vmem:[%s183 + $0x70] sm:$0xff]
        %v231 = vld [vmem:[%s183 + $0x78] sm:$0xff]
        %v232 = vld [vmem:[%s183 + $0x80] sm:$0xff]
        %v233 = vld [vmem:[%s183 + $0x88] sm:$0xff]
        %v234 = vld [vmem:[%s183 + $0x90] sm:$0xff]
        %v235 = vld [vmem:[%s183 + $0x98] sm:$0xff]
        %v236 = vld [vmem:[%s183 + $0xa0] sm:$0xff]
        %v237 = vld [vmem:[%s183 + $0xa8] sm:$0xff]
        %v238 = vld [vmem:[%s183 + $0xb0] sm:$0xff]
        %v239 = vld [vmem:[%s183 + $0xb8] sm:$0xff]
        %v240 = vld [vmem:[%s183 + $0xc0] sm:$0xff]
        %v241 = vld [vmem:[%s183 + $0xc8] sm:$0xff]
        %v242 = vld [vmem:[%s183 + $0xd0] sm:$0xff]
        %v243 = vld [vmem:[%s183 + $0xd8] sm:$0xff]
        %v244 = vld [vmem:[%s183 + $0xe0] sm:$0xff]
        %v245 = vld [vmem:[%s183 + $0xe8] sm:$0xff]
        %v246 = vld [vmem:[%s183 + $0xf0] sm:$0xff]
        %v247 = vld [vmem:[%s183 + $0xf8] sm:$0xff]
        %v248 = vld [vmem:[%s183 + $0x100] sm:$0xff]
        %v249 = vld [vmem:[%s183 + $0x108] sm:$0xff]
        %v250 = vld [vmem:[%s183 + $0x110] sm:$0xff]
        %v251 = vld [vmem:[%s183 + $0x118] sm:$0xff]
        %v252 = vld [vmem:[%s183 + $0x120] sm:$0xff]
        %v253 = vld [vmem:[%s183 + $0x128] sm:$0xff]
        %v254 = vld [vmem:[%s183 + $0x130] sm:$0xff]
        %v255 = vld [vmem:[%s183 + $0x138] sm:$0xff]
        %v256 = vld [vmem:[%s183 + $0x140] sm:$0xff]
        %v257 = vld [vmem:[%s183 + $0x148] sm:$0xff]
        %v258 = vld [vmem:[%s183 + $0x150] sm:$0xff]
        %v259 = vld [vmem:[%s183 + $0x158] sm:$0xff]
        %v260 = vld [vmem:[%s183 + $0x160] sm:$0xff]
        %v261 = vld [vmem:[%s183 + $0x168] sm:$0xff]
        %v262 = vld [vmem:[%s183 + $0x170] sm:$0xff]
        %v263 = vld [vmem:[%s183 + $0x178] sm:$0xff]
        %v264 = vld [vmem:[%s183 + $0x180] sm:$0xff]
        %v265 = vld [vmem:[%s183 + $0x188] sm:$0xff]
        %v266 = vld [vmem:[%s183 + $0x190] sm:$0xff]
        %v267 = vld [vmem:[%s183 + $0x198] sm:$0xff]
        %v268 = vld [vmem:[%s183 + $0x1a0] sm:$0xff]
        %v269 = vld [vmem:[%s183 + $0x1a8] sm:$0xff]
        %v270 = vld [vmem:[%s183 + $0x1b0] sm:$0xff]
        %v271 = vld [vmem:[%s183 + $0x1b8] sm:$0xff]
        %v272 = vld [vmem:[%s183 + $0x1c0] sm:$0xff]
        %v273 = vld [vmem:[%s183 + $0x1c8] sm:$0xff]
        %v274 = vld [vmem:[%s183 + $0x1d0] sm:$0xff]
        %v275 = vld [vmem:[%s183 + $0x1d8] sm:$0xff]
        %v276 = vld [vmem:[%s183 + $0x1e0] sm:$0xff]
        %v277 = vld [vmem:[%s183 + $0x1e8] sm:$0xff]
        %v278 = vld [vmem:[%s183 + $0x1f0] sm:$0xff]
        %v279 = vld [vmem:[%s183 + $0x1f8] sm:$0xff]
        %v280 = vld [vmem:[%s2] sm:$0xff]
        %282 = vset.pattern.permute.xlu0 0
        %283 = vperm.xlu0 %282, %v280
        %v284 = vpop.permute.xlu0 %283
        %v287 = vunpack.c.l.b16 %v215
        %v288 = vunpack.c.h.b16 %v215
        %v289 = vpack.c.b16 %v287, %v287
        %v290 = vpack.c.b16 %v288, %v288
        %v357 = vunpack.c.l.b16 %v216
        %v358 = vunpack.c.h.b16 %v216
        %v359 = vunpack.c.l.b16 %v217
        %v360 = vunpack.c.h.b16 %v217
        %v361 = vunpack.c.l.b16 %v218
        %v362 = vunpack.c.h.b16 %v218
        %v363 = vunpack.c.l.b16 %v219
        %v364 = vunpack.c.h.b16 %v219
        %v365 = vunpack.c.l.b16 %v220
        %v366 = vunpack.c.h.b16 %v220
        %v367 = vunpack.c.l.b16 %v221
        %v368 = vunpack.c.h.b16 %v221
        %v369 = vunpack.c.l.b16 %v222
        %v370 = vunpack.c.h.b16 %v222
        %v371 = vunpack.c.l.b16 %v223
        %v372 = vunpack.c.h.b16 %v223
        %v373 = vunpack.c.l.b16 %v224
        %v374 = vunpack.c.h.b16 %v224
        %v375 = vunpack.c.l.b16 %v225
        %v376 = vunpack.c.h.b16 %v225
        %v377 = vunpack.c.l.b16 %v226
        %v378 = vunpack.c.h.b16 %v226
        %v379 = vunpack.c.l.b16 %v227
        %v380 = vunpack.c.h.b16 %v227
        %v381 = vunpack.c.l.b16 %v228
        %v382 = vunpack.c.h.b16 %v228
        %v383 = vunpack.c.l.b16 %v229
        %v384 = vunpack.c.h.b16 %v229
        %v385 = vunpack.c.l.b16 %v230
        %v386 = vunpack.c.h.b16 %v230
        %v387 = vunpack.c.l.b16 %v231
        %v388 = vunpack.c.h.b16 %v231
        %v389 = vunpack.c.l.b16 %v232
        %v390 = vunpack.c.h.b16 %v232
        %v391 = vunpack.c.l.b16 %v233
        %v392 = vunpack.c.h.b16 %v233
        %v393 = vunpack.c.l.b16 %v234
        %v394 = vunpack.c.h.b16 %v234
        %v395 = vunpack.c.l.b16 %v235
        %v396 = vunpack.c.h.b16 %v235
        %v397 = vunpack.c.l.b16 %v236
        %v398 = vunpack.c.h.b16 %v236
        %v399 = vunpack.c.l.b16 %v237
        %v400 = vunpack.c.h.b16 %v237
        %v401 = vunpack.c.l.b16 %v238
        %v402 = vunpack.c.h.b16 %v238
        %v403 = vunpack.c.l.b16 %v239
        %v404 = vunpack.c.h.b16 %v239
        %v405 = vunpack.c.l.b16 %v240
        %v406 = vunpack.c.h.b16 %v240
        %v407 = vunpack.c.l.b16 %v241
        %v408 = vunpack.c.h.b16 %v241
        %v409 = vunpack.c.l.b16 %v242
        %v410 = vunpack.c.h.b16 %v242
        %v411 = vunpack.c.l.b16 %v243
        %v412 = vunpack.c.h.b16 %v243
        %v413 = vunpack.c.l.b16 %v244
        %v414 = vunpack.c.h.b16 %v244
        %v415 = vunpack.c.l.b16 %v245
        %v416 = vunpack.c.h.b16 %v245
        %v417 = vunpack.c.l.b16 %v246
        %v418 = vunpack.c.h.b16 %v246
        %v419 = vunpack.c.l.b16 %v247
        %v420 = vunpack.c.h.b16 %v247
        %v421 = vunpack.c.l.b16 %v248
        %v422 = vunpack.c.h.b16 %v248
        %v423 = vunpack.c.l.b16 %v249
        %v424 = vunpack.c.h.b16 %v249
        %v425 = vunpack.c.l.b16 %v250
        %v426 = vunpack.c.h.b16 %v250
        %v427 = vunpack.c.l.b16 %v251
        %v428 = vunpack.c.h.b16 %v251
        %v429 = vunpack.c.l.b16 %v252
        %v430 = vunpack.c.h.b16 %v252
        %v431 = vunpack.c.l.b16 %v253
        %v432 = vunpack.c.h.b16 %v253
        %v433 = vunpack.c.l.b16 %v254
        %v434 = vunpack.c.h.b16 %v254
        %v435 = vunpack.c.l.b16 %v255
        %v436 = vunpack.c.h.b16 %v255
        %v437 = vunpack.c.l.b16 %v256
        %v438 = vunpack.c.h.b16 %v256
        %v439 = vunpack.c.l.b16 %v257
        %v440 = vunpack.c.h.b16 %v257
        %v441 = vunpack.c.l.b16 %v258
        %v442 = vunpack.c.h.b16 %v258
        %v443 = vunpack.c.l.b16 %v259
        %v444 = vunpack.c.h.b16 %v259
        %v445 = vunpack.c.l.b16 %v260
        %v446 = vunpack.c.h.b16 %v260
        %v447 = vunpack.c.l.b16 %v261
        %v448 = vunpack.c.h.b16 %v261
        %v449 = vunpack.c.l.b16 %v262
        %v450 = vunpack.c.h.b16 %v262
        %v451 = vunpack.c.l.b16 %v263
        %v452 = vunpack.c.h.b16 %v263
        %v453 = vunpack.c.l.b16 %v264
        %v454 = vunpack.c.h.b16 %v264
        %v455 = vunpack.c.l.b16 %v265
        %v456 = vunpack.c.h.b16 %v265
        %v457 = vunpack.c.l.b16 %v266
        %v458 = vunpack.c.h.b16 %v266
        %v459 = vunpack.c.l.b16 %v267
        %v460 = vunpack.c.h.b16 %v267
        %v461 = vunpack.c.l.b16 %v268
        %v462 = vunpack.c.h.b16 %v268
        %v463 = vunpack.c.l.b16 %v269
        %v464 = vunpack.c.h.b16 %v269
        %v465 = vunpack.c.l.b16 %v270
        %v466 = vunpack.c.h.b16 %v270
        %v467 = vunpack.c.l.b16 %v271
        %v468 = vunpack.c.h.b16 %v271
        %v469 = vunpack.c.l.b16 %v272
        %v470 = vunpack.c.h.b16 %v272
        %v471 = vunpack.c.l.b16 %v273
        %v472 = vunpack.c.h.b16 %v273
        %v473 = vunpack.c.l.b16 %v274
        %v474 = vunpack.c.h.b16 %v274
        %v475 = vunpack.c.l.b16 %v275
        %v476 = vunpack.c.h.b16 %v275
        %v477 = vunpack.c.l.b16 %v276
        %v478 = vunpack.c.h.b16 %v276
        %v479 = vunpack.c.l.b16 %v277
        %v480 = vunpack.c.h.b16 %v277
        %v481 = vunpack.c.l.b16 %v278
        %v482 = vunpack.c.h.b16 %v278
        %v483 = vunpack.c.l.b16 %v279
        %v484 = vunpack.c.h.b16 %v279
        %v485 = vpack.c.b16 %v361, %v357
        %v486 = vpack.c.b16 %v362, %v358
        %v487 = vpack.c.b16 %v363, %v359
        %v488 = vpack.c.b16 %v364, %v360
        %v489 = vpack.c.b16 %v369, %v365
        %v490 = vpack.c.b16 %v370, %v366
        %v491 = vpack.c.b16 %v371, %v367
        %v492 = vpack.c.b16 %v372, %v368
        %v493 = vpack.c.b16 %v377, %v373
        %v494 = vpack.c.b16 %v378, %v374
        %v495 = vpack.c.b16 %v379, %v375
        %v496 = vpack.c.b16 %v380, %v376
        %v497 = vpack.c.b16 %v385, %v381
        %v498 = vpack.c.b16 %v386, %v382
        %v499 = vpack.c.b16 %v387, %v383
        %v500 = vpack.c.b16 %v388, %v384
        %v501 = vpack.c.b16 %v393, %v389
        %v502 = vpack.c.b16 %v394, %v390
        %v503 = vpack.c.b16 %v395, %v391
        %v504 = vpack.c.b16 %v396, %v392
        %v505 = vpack.c.b16 %v401, %v397
        %v506 = vpack.c.b16 %v402, %v398
        %v507 = vpack.c.b16 %v403, %v399
        %v508 = vpack.c.b16 %v404, %v400
        %v509 = vpack.c.b16 %v409, %v405
        %v510 = vpack.c.b16 %v410, %v406
        %v511 = vpack.c.b16 %v411, %v407
        %v512 = vpack.c.b16 %v412, %v408
        %v513 = vpack.c.b16 %v417, %v413
        %v514 = vpack.c.b16 %v418, %v414
        %v515 = vpack.c.b16 %v419, %v415
        %v516 = vpack.c.b16 %v420, %v416
        %v517 = vpack.c.b16 %v425, %v421
        %v518 = vpack.c.b16 %v426, %v422
        %v519 = vpack.c.b16 %v427, %v423
        %v520 = vpack.c.b16 %v428, %v424
        %v521 = vpack.c.b16 %v433, %v429
        %v522 = vpack.c.b16 %v434, %v430
        %v523 = vpack.c.b16 %v435, %v431
        %v524 = vpack.c.b16 %v436, %v432
        %v525 = vpack.c.b16 %v441, %v437
        %v526 = vpack.c.b16 %v442, %v438
        %v527 = vpack.c.b16 %v443, %v439
        %v528 = vpack.c.b16 %v444, %v440
        %v529 = vpack.c.b16 %v449, %v445
        %v530 = vpack.c.b16 %v450, %v446
        %v531 = vpack.c.b16 %v451, %v447
        %v532 = vpack.c.b16 %v452, %v448
        %v533 = vpack.c.b16 %v457, %v453
        %v534 = vpack.c.b16 %v458, %v454
        %v535 = vpack.c.b16 %v459, %v455
        %v536 = vpack.c.b16 %v460, %v456
        %v537 = vpack.c.b16 %v465, %v461
        %v538 = vpack.c.b16 %v466, %v462
        %v539 = vpack.c.b16 %v467, %v463
        %v540 = vpack.c.b16 %v468, %v464
        %v541 = vpack.c.b16 %v473, %v469
        %v542 = vpack.c.b16 %v474, %v470
        %v543 = vpack.c.b16 %v475, %v471
        %v544 = vpack.c.b16 %v476, %v472
        %v545 = vpack.c.b16 %v481, %v477
        %v546 = vpack.c.b16 %v482, %v478
        %v547 = vpack.c.b16 %v483, %v479
        %v548 = vpack.c.b16 %v484, %v480
        %613 = vmatpush.bf16.msra.mxu0 %v513
        %614 = vmatpush.bf16.msra.mxu0 %v509
        %615 = vmatpush.bf16.msra.mxu0 %v505
        %616 = vmatpush.bf16.msra.mxu0 %v501
        %617 = vmatpush.bf16.msra.mxu0 %v497
        %618 = vmatpush.bf16.msra.mxu0 %v493
        %619 = vmatpush.bf16.msra.mxu0 %v489
        %620 = vmatpush.bf16.msra.mxu0 %v485
        %621 = vmatmul.bf16.gmra.mxu0 %v289
        %v622 = vpop.f32.mrf.mxu0
        %v623 = vadd.f32 %v284, %v622
        %v624 = vpop.f32.mrf.mxu0
        %625 = vdwg.mxu0
        %626 = vmatpush.bf16.msra.mxu0 %v545
        %627 = vmatpush.bf16.msra.mxu0 %v541
        %628 = vmatpush.bf16.msra.mxu0 %v537
        %629 = vmatpush.bf16.msra.mxu0 %v533
        %630 = vmatpush.bf16.msra.mxu0 %v529
        %631 = vmatpush.bf16.msra.mxu0 %v525
        %632 = vmatpush.bf16.msra.mxu0 %v521
        %633 = vmatpush.bf16.msra.mxu0 %v517
        %634 = vmatmul.bf16.gmra.mxu0 %v290
        %v635 = vpop.f32.mrf.mxu0
        %v636 = vadd.f32 %v623, %v635
        %v637 = vpop.f32.mrf.mxu0
        %638 = vdwg.mxu0
        %639 = vmatpush.bf16.msra.mxu0 %v514
        %640 = vmatpush.bf16.msra.mxu0 %v510
        %641 = vmatpush.bf16.msra.mxu0 %v506
        %642 = vmatpush.bf16.msra.mxu0 %v502
        %643 = vmatpush.bf16.msra.mxu0 %v498
        %644 = vmatpush.bf16.msra.mxu0 %v494
        %645 = vmatpush.bf16.msra.mxu0 %v490
        %646 = vmatpush.bf16.msra.mxu0 %v486
        %647 = vmatmul.bf16.gmra.mxu0 %v289
        %v648 = vpop.f32.mrf.mxu0
        %v649 = vadd.f32 %v284, %v648
        %v650 = vpop.f32.mrf.mxu0
        %651 = vdwg.mxu0
        %652 = vmatpush.bf16.msra.mxu0 %v546
        %653 = vmatpush.bf16.msra.mxu0 %v542
        %654 = vmatpush.bf16.msra.mxu0 %v538
        %655 = vmatpush.bf16.msra.mxu0 %v534
        %656 = vmatpush.bf16.msra.mxu0 %v530
        %657 = vmatpush.bf16.msra.mxu0 %v526
        %658 = vmatpush.bf16.msra.mxu0 %v522
        %659 = vmatpush.bf16.msra.mxu0 %v518
        %660 = vmatmul.bf16.gmra.mxu0 %v290
        %v661 = vpop.f32.mrf.mxu0
        %v662 = vadd.f32 %v649, %v661
        %v663 = vpop.f32.mrf.mxu0
        %664 = vdwg.mxu0
        %665 = vmatpush.bf16.msra.mxu0 %v515
        %666 = vmatpush.bf16.msra.mxu0 %v511
        %667 = vmatpush.bf16.msra.mxu0 %v507
        %668 = vmatpush.bf16.msra.mxu0 %v503
        %669 = vmatpush.bf16.msra.mxu0 %v499
        %670 = vmatpush.bf16.msra.mxu0 %v495
        %671 = vmatpush.bf16.msra.mxu0 %v491
        %672 = vmatpush.bf16.msra.mxu0 %v487
        %673 = vmatmul.bf16.gmra.mxu0 %v289
        %v674 = vpop.f32.mrf.mxu0
        %v675 = vadd.f32 %v284, %v674
        %v676 = vpop.f32.mrf.mxu0
        %677 = vdwg.mxu0
        %678 = vmatpush.bf16.msra.mxu0 %v547
        %679 = vmatpush.bf16.msra.mxu0 %v543
        %680 = vmatpush.bf16.msra.mxu0 %v539
        %681 = vmatpush.bf16.msra.mxu0 %v535
        %682 = vmatpush.bf16.msra.mxu0 %v531
        %683 = vmatpush.bf16.msra.mxu0 %v527
        %684 = vmatpush.bf16.msra.mxu0 %v523
        %685 = vmatpush.bf16.msra.mxu0 %v519
        %686 = vmatmul.bf16.gmra.mxu0 %v290
        %v687 = vpop.f32.mrf.mxu0
        %v688 = vadd.f32 %v675, %v687
        %v689 = vpop.f32.mrf.mxu0
        %690 = vdwg.mxu0
        %691 = vmatpush.bf16.msra.mxu0 %v516
        %692 = vmatpush.bf16.msra.mxu0 %v512
        %693 = vmatpush.bf16.msra.mxu0 %v508
        %694 = vmatpush.bf16.msra.mxu0 %v504
        %695 = vmatpush.bf16.msra.mxu0 %v500
        %696 = vmatpush.bf16.msra.mxu0 %v496
        %697 = vmatpush.bf16.msra.mxu0 %v492
        %698 = vmatpush.bf16.msra.mxu0 %v488
        %699 = vmatmul.bf16.gmra.mxu0 %v289
        %v700 = vpop.f32.mrf.mxu0
        %v701 = vadd.f32 %v284, %v700
        %v702 = vpop.f32.mrf.mxu0
        %703 = vdwg.mxu0
        %704 = vmatpush.bf16.msra.mxu0 %v548
        %705 = vmatpush.bf16.msra.mxu0 %v544
        %706 = vmatpush.bf16.msra.mxu0 %v540
        %707 = vmatpush.bf16.msra.mxu0 %v536
        %708 = vmatpush.bf16.msra.mxu0 %v532
        %709 = vmatpush.bf16.msra.mxu0 %v528
        %710 = vmatpush.bf16.msra.mxu0 %v524
        %711 = vmatpush.bf16.msra.mxu0 %v520
        %712 = vmatmul.bf16.gmra.mxu0 %v290
        %v713 = vpop.f32.mrf.mxu0
        %v714 = vadd.f32 %v701, %v713
        %v715 = vpop.f32.mrf.mxu0
        %716 = vdwg.mxu0
        %v717 = vld [vmem:[#allocation2] sm:$0xff]
        %v718 = vadd.f32 %v636, %v662
        %v719 = vadd.f32 %v718, %v688
        %v720 = vadd.f32 %v719, %v714
        %721 = vadd.xlane.f32.xlu0 %v720
        %v722 = vpop.xlane.xlu0 %721
        %v723 = vadd.f32 %v717, %v722
        %vm724 = vcmask 7168
        %725 = vst.msk [vmem:[#allocation2] sm:$0xff] %vm724, %v723
        %v726 = vld [vmem:[#allocation3] sm:$0xff]
        %v727 = vmul.f32 %v636, %v636
        %v728 = vmul.f32 %v662, %v662
        %v729 = vmul.f32 %v688, %v688
        %v730 = vmul.f32 %v714, %v714
        %v731 = vadd.f32 %v727, %v728
        %v732 = vadd.f32 %v731, %v729
        %v733 = vadd.f32 %v732, %v730
        %734 = vadd.xlane.f32.xlu0 %v733
        %v735 = vpop.xlane.xlu0 %734
        %v736 = vadd.f32 %v726, %v735
        %737 = vst.msk [vmem:[#allocation3] sm:$0xff] %vm724, %v736
        %s738 = smul.u32 %s25, 4
        %s739 = smul.addr %s738, 8
        %s740 = scalar_lea.vmem %s206, %s739 [#allocation7]
        %741 = vst [vmem:[%s740] sm:$0xff] %v636
        %742 = vst [vmem:[%s740 + $0x8] sm:$0xff] %v662
        %743 = vst [vmem:[%s740 + $0x10] sm:$0xff] %v688
        %744 = vst [vmem:[%s740 + $0x18] sm:$0xff] %v714
        // Predicated region
        $region41: #{tpu_custom_call.1} parent=31 // pred_check
          %p745 = pneg %p208
        $region42: #{tpu_custom_call.1} parent=31 // pred_check_branch
          %747 = sbr.rel (%p745) target = $region44
        $region43: #{tpu_custom_call.1} parent=31 // pred_region
          %v748 = vld [vmem:[#allocation2] sm:$0xff]
          %v749 = vmul.f32 %v748, 0.001953125
          %v750 = vld [vmem:[#allocation3] sm:$0xff]
          %v751 = vmul.f32 %v750, 0.001953125
          %v752 = vmul.f32 %v749, %v749
          %v753 = vsub.f32 %v751, %v752
          %v754 = vmax.f32 %v753, 0.0
          %v755 = vadd.f32 %v754, 1e-05
          %v756 = vrsqrt.pop %v755
          %v757 = vmul.f32 %v756, %v755
          %v758 = vmul.f32 %v757, %v756
          %v759 = vmul.f32 0.5, %v758
          %v760 = vsub.f32 1.5, %v759
          %v761 = vmul.f32 %v756, %v760
          %vm762 = vweird.f32 %v755
          %vm763 = vweird.f32 %v756
          %vm764 = vmor %vm762, %vm763
          %v765 = vsel %vm764, %v756, %v761
          %v766 = vld [vmem:[%s2] sm:$0xff]
          %768 = vrot.lane.b32.xlu0 %v766, 127
          %v769 = vpop.permute.xlu0 %768
          %v771 = vmul.f32 %v765, %v769
          %v772 = vld [vmem:[%s206] sm:$0xff]
          %v773 = vld [vmem:[%s206 + $0x8] sm:$0xff]
          %v774 = vld [vmem:[%s206 + $0x10] sm:$0xff]
          %v775 = vld [vmem:[%s206 + $0x18] sm:$0xff]
          %777 = vset.pattern.permute.xlu0 0
          %778 = vperm.xlu0 %777, %v749
          %v779 = vpop.permute.xlu0 %778
          %v781 = vsub.f32 %v772, %v779
          %v782 = vsub.f32 %v773, %v779
          %v783 = vsub.f32 %v774, %v779
          %v784 = vsub.f32 %v775, %v779
          %786 = vset.pattern.permute.xlu0 0
          %787 = vperm.xlu0 %786, %v771
          %v788 = vpop.permute.xlu0 %787
          %v790 = vmul.f32 %v781, %v788
          %v791 = vmul.f32 %v782, %v788
          %v792 = vmul.f32 %v783, %v788
          %v793 = vmul.f32 %v784, %v788
          %794 = vset.pattern.permute.xlu0 2
          %795 = vperm.xlu0 %794, %v766
          %v796 = vpop.permute.xlu0 %795
          %v798 = vadd.f32 %v790, %v796
          %v799 = vadd.f32 %v791, %v796
          %v800 = vadd.f32 %v792, %v796
          %v801 = vadd.f32 %v793, %v796
          %vm802 = vcmp.ge.f32.partialorder %v798, 0.0
          %vm803 = vcmp.ge.f32.partialorder %v799, 0.0
          %vm804 = vcmp.ge.f32.partialorder %v800, 0.0
          %vm805 = vcmp.ge.f32.partialorder %v801, 0.0
          %v806 = vmul.f32 %v798, 0.2
          %v807 = vmul.f32 %v799, 0.2
          %v808 = vmul.f32 %v800, 0.2
          %v809 = vmul.f32 %v801, 0.2
          %v810 = vsel %vm802, %v798, %v806
          %v811 = vsel %vm803, %v799, %v807
          %v812 = vsel %vm804, %v800, %v808
          %v813 = vsel %vm805, %v801, %v809
          %814 = vst [vmem:[%s206] sm:$0xff] %v810
          %815 = vst [vmem:[%s206 + $0x8] sm:$0xff] %v811
          %816 = vst [vmem:[%s206 + $0x10] sm:$0xff] %v812
          %817 = vst [vmem:[%s206 + $0x18] sm:$0xff] %v813
        $region44: #{tpu_custom_call.1} parent=31 // pred_fallthru
          _
        %s818 = sand.u32 %s110, 1
        %s819 = scalar_lea.sflag [#allocation6], %s818
        %s820 = sand.u32 %s110, 1
        %s821 = smul.addr %s820, 32
        %s822 = scalar_lea.vmem [#allocation7], %s821
        // Predicated region
        $region45: #{tpu_custom_call.1} parent=31 // pred_check
          %p823 = pneg %p120
        $region46: #{tpu_custom_call.1} parent=31 // pred_check_branch
          %825 = sbr.rel (%p823) target = $region48
        $region47: #{tpu_custom_call.1} parent=31 // pred_region
          %827 = vsyncadd %s819, 0
          %s828 = smul.addr %s24, 4
          %s829 = smul.addr %s828, 8
          %s830 = scalar_lea.hbm %s3, %s829
          %s832 = sshll.u32 %s822, 4
          %s833 = int_to_ptr.vmem [resolvable:$true] %s832
          %s834 = sshll.u32 %s830, 4
          %s835 = int_to_ptr.hbm [resolvable:$true] %s834
          %837 = dma.vmem_to_hbm [thread:$0]  %s833, 512, %s835, %s819
        $region48: #{tpu_custom_call.1} parent=31 // pred_fallthru
          _
      $region32: #{tpu_custom_call.1} parent=5 // pred_fallthru
        _
      %p838 = scmp.le.s32.totalorder 2, %s15
      // Predicated region
      $region49: #{tpu_custom_call.1} parent=5 // pred_check
        %p839 = pneg %p838
      $region50: #{tpu_custom_call.1} parent=5 // pred_check_branch
        %841 = sbr.rel (%p839) target = $region52
      $region51: #{tpu_custom_call.1} parent=5 // pred_region
        %s842 = ssub.s32 %s15, 2
        // Predicated region
        $region53: #{tpu_custom_call.1} parent=51 // pred_check
          %p843 = pneg %p126
        $region54: #{tpu_custom_call.1} parent=51 // pred_check_branch
          %845 = sbr.rel (%p843) target = $region56
        $region55: #{tpu_custom_call.1} parent=51 // pred_region
          %s846 = sand.u32 %s111, 1
          %s847 = scalar_lea.sflag [#allocation6], %s846
          %s848 = sand.u32 %s111, 1
          %s849 = smul.addr %s848, 32
          %s850 = scalar_lea.vmem [#allocation7], %s849
          %852 = dma.done %s847, 512
        $region56: #{tpu_custom_call.1} parent=51 // pred_fallthru
          _
      $region52: #{tpu_custom_call.1} parent=5 // pred_fallthru
        _
    $region6: #{tpu_custom_call.1} parent=1 // loop_footer
      %s19 = sadd.s32 1, %s15
    $region7: #{tpu_custom_call.1} parent=1 // loop_footer_branch
      %14 = sbr.rel target = $region3
    $region8: #{tpu_custom_call.1} parent=1 // loop_exit
      _
    %853 = vsyncpa [#allocation5], 1
    %s854 = scalar_lea.sflag [#allocation5], 1
    %855 = vsyncpa %s854, 1
    %856 = vsyncpa [#allocation6], 1
    %s857 = scalar_lea.sflag [#allocation6], 1
    %858 = vsyncpa %s857, 1

</llo_original>
